<compile_context>
chip_gen: v7x
topology: tpu7x:2x2x1
jax: 0.10.0
libtpu: 0.0.40
codegen_flags: <defaults>
</compile_context>

<pallas_src>
import functools

import jax
import jax.numpy as jnp
from jax.experimental import pallas as pl
from jax.experimental.pallas import tpu as pltpu


def _round_up(x, m):
    return ((x + m - 1) // m) * m


def _smear_rows_kernel(dist_ref, out_ref, *, coeff, start, delta, num_gaussians):
    # dist_ref: (TN, 1) f32 tile of distances; out_ref: (TN, G) output tile.
    tn = dist_ref.shape[0]
    g = jax.lax.broadcasted_iota(jnp.int32, (tn, num_gaussians), 1).astype(jnp.float32)
    off = start + delta * g                     # (TN, G), constants baked in
    diff = dist_ref[...] - off                  # (TN,1) - (TN,G) -> (TN, G)
    out_ref[...] = jnp.exp(coeff * diff * diff).astype(out_ref.dtype)


def _smear_lanes_kernel(dist_ref, out_ref, *, coeff, start, delta, num_gaussians):
    # Lane-dense transposed form: dist_ref (1, TN); out_ref (G, TN).
    tn = dist_ref.shape[1]
    g = jax.lax.broadcasted_iota(jnp.int32, (num_gaussians, tn), 0).astype(jnp.float32)
    off = start + delta * g                     # (G, TN)
    diff = dist_ref[...] - off                  # (1,TN) - (G,TN) -> (G, TN)
    out_ref[...] = jnp.exp(coeff * diff * diff).astype(out_ref.dtype)


def gaussian_smearing(dist, *, start=0.0, stop=5.0, num_gaussians=50,
                      tile_n=8192, out_dtype=jnp.float32, layout="ng"):
    """dist: any-shape float array.

    layout="ng": returns (dist.size, num_gaussians)   -- PyTorch layout (default).
    layout="gn": returns (num_gaussians, dist.size)   -- lane-dense, cheaper stores.
    out_dtype=jnp.bfloat16 halves the HBM store bytes (compute stays f32).
    """
    assert num_gaussians >= 2, "num_gaussians must be >= 2"
    assert layout in ("ng", "gn")

    # Parameter setup (mirrors the PyTorch module __init__). delta/coeff/start are
    # static python scalars baked into the kernel.
    delta = (stop - start) / (num_gaussians - 1)
    coeff = -0.5 / (delta ** 2)

    d = jnp.asarray(dist, jnp.float32).reshape(-1)
    n = d.shape[0]
    g = num_gaussians
    itemsize = jnp.dtype(out_dtype).itemsize

    if layout == "ng":
        # Rows on the sublane axis, G=50 on the (padded) lane axis.
        tile = max(8, min(_round_up(int(tile_n), 8), _round_up(n, 8)))
        grid = (pl.cdiv(n, tile),)
        d_in = d.reshape(n, 1)
        in_spec = pl.BlockSpec((tile, 1), lambda i: (i, 0))
        out_spec = pl.BlockSpec((tile, g), lambda i: (i, 0))
        out_shape = jax.ShapeDtypeStruct((n, g), out_dtype)
        kernel = functools.partial(_smear_rows_kernel, coeff=coeff, start=start,
                                   delta=delta, num_gaussians=g)
        # Padded VMEM bytes per buffer: dist lane-pads 1->128, output lane-pads g->128.
        block_bytes = tile * 128 * 4 + tile * _round_up(g, 128) * itemsize
    else:
        # Lane-dense: N on the lane axis (multiples of 128), G on sublanes.
        tile = max(128, min(_round_up(int(tile_n), 128), _round_up(n, 128)))
        grid = (pl.cdiv(n, tile),)
        d_in = d.reshape(1, n)
        in_spec = pl.BlockSpec((1, tile), lambda i: (0, i))
        out_spec = pl.BlockSpec((g, tile), lambda i: (0, i))
        out_shape = jax.ShapeDtypeStruct((g, n), out_dtype)
        kernel = functools.partial(_smear_lanes_kernel, coeff=coeff, start=start,
                                   delta=delta, num_gaussians=g)
        block_bytes = 8 * tile * 4 + _round_up(g, 8) * tile * itemsize

    # Explicit VMEM budget: double-buffered blocks + headroom, capped at v7x's
    # 64 MiB physical VMEM. (v5e's 16 MiB scoped default would otherwise bite.)
    vmem_limit = int(min(max(4 * block_bytes, 32 << 20), 64 << 20))

    cost = pl.CostEstimate(
        flops=3 * n * g,
        transcendentals=n * g,
        bytes_accessed=int(4 * n + n * g * itemsize),
    )

    def run(dim_sem):
        return pl.pallas_call(
            kernel,
            out_shape=out_shape,
            grid_spec=pltpu.PrefetchScalarGridSpec(
                num_scalar_prefetch=0,
                grid=grid,
                in_specs=[in_spec],
                out_specs=out_spec,
            ),
            compiler_params=pltpu.CompilerParams(
                dimension_semantics=(dim_sem,),
                vmem_limit_bytes=vmem_limit),
            cost_estimate=cost,
        )(d_in)

    # v7x: shard the row grid across both TensorCores. Fall back to plain
    # "parallel" on generations / jax versions that reject CORE_PARALLEL.
    core_parallel = getattr(pltpu, "CORE_PARALLEL", None)
    if core_parallel is not None:
        try:
            return jax.block_until_ready(run(core_parallel))
        except Exception:
            pass
    return run("parallel")


def _reference(dist, start=0.0, stop=5.0, num_gaussians=50):
    offset = jnp.linspace(start, stop, num_gaussians, dtype=jnp.float32)
    delta = (stop - start) / (num_gaussians - 1)
    coeff = -0.5 / (delta ** 2)
    d = dist.reshape(-1, 1).astype(jnp.float32) - offset.reshape(1, -1)
    return jnp.exp(coeff * d * d)


if __name__ == "__main__":
    key = jax.random.PRNGKey(0)
    k1, k2 = jax.random.split(key)

    # Synthetic "pairwise distances", e.g. 64 edges in [0, 5).
    dist = jax.random.uniform(k1, (64,), dtype=jnp.float32) * 5.0
    out = jax.block_until_ready(gaussian_smearing(dist))
    ref = _reference(dist)
    assert out.shape == (64, 50), out.shape
    assert jnp.allclose(out, ref, atol=2e-5, rtol=2e-5), \
        float(jnp.max(jnp.abs(out - ref)))

    # Ragged size (n not a multiple of the tile / 8) exercises the masked last block.
    dist2 = jax.random.uniform(k2, (37,), dtype=jnp.float32) * 5.0
    out2 = jax.block_until_ready(gaussian_smearing(dist2))
    ref2 = _reference(dist2)
    assert out2.shape == (37, 50), out2.shape
    assert jnp.allclose(out2, ref2, atol=2e-5, rtol=2e-5), \
        float(jnp.max(jnp.abs(out2 - ref2)))

    # Lane-dense transposed layout (G, N) for consumers that accept it.
    out3 = jax.block_until_ready(gaussian_smearing(dist2, layout="gn"))
    assert out3.shape == (50, 37), out3.shape
    assert jnp.allclose(out3, ref2.T, atol=2e-5, rtol=2e-5), \
        float(jnp.max(jnp.abs(out3 - ref2.T)))

    # bf16 output: halves the store bytes of this store-bound kernel (f32 compute).
    out4 = jax.block_until_ready(gaussian_smearing(dist, out_dtype=jnp.bfloat16))
    assert out4.shape == (64, 50), out4.shape
    assert jnp.allclose(out4.astype(jnp.float32), ref, atol=1e-2, rtol=1e-2)

    print("KERNEL_OK")
</pallas_src>

<mosaic_0001>
module attributes {stable_mosaic.version = 11 : i64} {
  func.func @_smear_rows_kernel(%arg0: i32, %arg1: memref<64x1xf32, #tpu.memory_space<vmem>>, %arg2: memref<64x50xf32, #tpu.memory_space<vmem>>) attributes {dimension_semantics = [#tpu.dimension_semantics<core_parallel>], iteration_bounds = array<i64: 1>, scalar_prefetch = 0 : i64, scratch_operands = 0 : i64, tpu.core_type = #tpu.core_type<tc>, window_params = [{transform_indices = @transform_0, window_bounds = array<i64: 64, 1>}, {transform_indices = @transform_1, window_bounds = array<i64: 64, 50>}]} {
    %0 = tpu.iota {dimensions = array<i32: 1>} : vector<64x50xi32>
    %1 = arith.sitofp %0 : vector<64x50xi32> to vector<64x50xf32>
    %cst = arith.constant 0.10204082 : f32
    %2 = vector.broadcast %cst : f32 to vector<64x50xf32>
    %3 = arith.mulf %2, %1 : vector<64x50xf32>
    %cst_0 = arith.constant 0.000000e+00 : f32
    %4 = vector.broadcast %cst_0 : f32 to vector<64x50xf32>
    %5 = arith.addf %4, %3 : vector<64x50xf32>
    %c0 = arith.constant 0 : index
    %c0_1 = arith.constant 0 : index
    %6 = vector.load %arg1[%c0, %c0_1] : memref<64x1xf32, #tpu.memory_space<vmem>>, vector<64x1xf32>
    %7 = vector.broadcast %6 : vector<64x1xf32> to vector<64x50xf32>
    %8 = arith.subf %7, %5 : vector<64x50xf32>
    %cst_2 = arith.constant -4.802000e+01 : f32
    %9 = vector.broadcast %cst_2 : f32 to vector<64x50xf32>
    %10 = arith.mulf %9, %8 : vector<64x50xf32>
    %11 = arith.mulf %10, %8 : vector<64x50xf32>
    %12 = math.exp %11 : vector<64x50xf32>
    %c0_3 = arith.constant 0 : index
    %c0_4 = arith.constant 0 : index
    %13 = vector.load %arg2[%c0_3, %c0_4] : memref<64x50xf32, #tpu.memory_space<vmem>>, vector<64x50xf32>
    tpu.vector_store %arg2[%c0_3, %c0_4], %12 {strides = array<i32>} : memref<64x50xf32, #tpu.memory_space<vmem>>, vector<64x50xf32>,
    return
  }
  func.func @transform_0(%arg0: i32) -> (i32, i32) {
    %c0_i32 = arith.constant 0 : i32
    %c0_i32_0 = arith.constant 0 : i32
    return %arg0, %c0_i32 : i32, i32
  }
  func.func @transform_1(%arg0: i32) -> (i32, i32) {
    %c0_i32 = arith.constant 0 : i32
    %c0_i32_0 = arith.constant 0 : i32
    return %arg0, %c0_i32 : i32, i32
  }
}

module attributes {stable_mosaic.version = 11 : i64} {
  func.func @_smear_rows_kernel(%arg0: i32, %arg1: memref<64x1xf32, #tpu.memory_space<vmem>>, %arg2: memref<64x50xf32, #tpu.memory_space<vmem>>) attributes {dimension_semantics = [#tpu.dimension_semantics<parallel>], iteration_bounds = array<i64: 1>, scalar_prefetch = 0 : i64, scratch_operands = 0 : i64, tpu.core_type = #tpu.core_type<tc>, window_params = [{transform_indices = @transform_0, window_bounds = array<i64: 64, 1>}, {transform_indices = @transform_1, window_bounds = array<i64: 64, 50>}]} {
    %0 = tpu.iota {dimensions = array<i32: 1>} : vector<64x50xi32>
    %1 = arith.sitofp %0 : vector<64x50xi32> to vector<64x50xf32>
    %cst = arith.constant 0.10204082 : f32
    %2 = vector.broadcast %cst : f32 to vector<64x50xf32>
    %3 = arith.mulf %2, %1 : vector<64x50xf32>
    %cst_0 = arith.constant 0.000000e+00 : f32
    %4 = vector.broadcast %cst_0 : f32 to vector<64x50xf32>
    %5 = arith.addf %4, %3 : vector<64x50xf32>
    %c0 = arith.constant 0 : index
    %c0_1 = arith.constant 0 : index
    %6 = vector.load %arg1[%c0, %c0_1] : memref<64x1xf32, #tpu.memory_space<vmem>>, vector<64x1xf32>
    %7 = vector.broadcast %6 : vector<64x1xf32> to vector<64x50xf32>
    %8 = arith.subf %7, %5 : vector<64x50xf32>
    %cst_2 = arith.constant -4.802000e+01 : f32
    %9 = vector.broadcast %cst_2 : f32 to vector<64x50xf32>
    %10 = arith.mulf %9, %8 : vector<64x50xf32>
    %11 = arith.mulf %10, %8 : vector<64x50xf32>
    %12 = math.exp %11 : vector<64x50xf32>
    %c0_3 = arith.constant 0 : index
    %c0_4 = arith.constant 0 : index
    %13 = vector.load %arg2[%c0_3, %c0_4] : memref<64x50xf32, #tpu.memory_space<vmem>>, vector<64x50xf32>
    tpu.vector_store %arg2[%c0_3, %c0_4], %12 {strides = array<i32>} : memref<64x50xf32, #tpu.memory_space<vmem>>, vector<64x50xf32>,
    return
  }
  func.func @transform_0(%arg0: i32) -> (i32, i32) {
    %c0_i32 = arith.constant 0 : i32
    %c0_i32_0 = arith.constant 0 : i32
    return %arg0, %c0_i32 : i32, i32
  }
  func.func @transform_1(%arg0: i32) -> (i32, i32) {
    %c0_i32 = arith.constant 0 : i32
    %c0_i32_0 = arith.constant 0 : i32
    return %arg0, %c0_i32 : i32, i32
  }
}

</mosaic_0001>

<llo_original>
// kernel: tpu_custom_call.1
$region0: #{tpu_custom_call.1}
  #allocation0 [shape = 'u32[]', space=smem, size = 0x4, offset = 0x4, fixed_abs, tag = 'smem constant byte address 0x4 - core index']
  #allocation1 [shape = 'u32[144,128]{1,0:T(1,128)}', space=vmem, size = 0x12000, scoped, tag = 'internal scratch']
  %s0 = inlined_call_operand.vmem [shape: f32[64,1], index: 0, kind: input, shape index: {}]
  %s1 = inlined_call_operand.vmem [shape: f32[64,50], index: 1, kind: output, shape index: {}]
  %s2 = sld [smem:[#allocation0]]
  $region14: #{tpu_custom_call.1} parent=0
    _
  %s4 = ssub.s32 1, %s2
  %s5 = scalar_select 0, %s4, %s2
  // Predicated region
  $region2: #{tpu_custom_call.1} parent=0 // pred_check
    _
  $region3: #{tpu_custom_call.1} parent=0 // pred_check_branch
    %7 = sbr.rel (0) target = $region5
  $region4: #{tpu_custom_call.1} parent=0 // pred_region
    %s8 = smul.u32 8, %s5
    %p9 = scmp.lt.s32.totalorder %s8, 7
    %s10 = scalar_select %p9, %s8, 7
    %s11 = smul.addr %s10, 8
    %s12 = scalar_lea.vmem %s0, %s11
    %s13 = smul.u32 8, %s5
  $region5: #{tpu_custom_call.1} parent=0 // pred_fallthru
    _
  %s14 = smul.u32 8, %s5
  %p15 = scmp.lt.s32.totalorder %s14, 7
  %s16 = scalar_select %p15, %s14, 7
  %s17 = smul.addr %s16, 8
  %s18 = scalar_lea.vmem %s0, %s17
  %s19 = smul.u32 8, %s5
  %p20 = scmp.lt.s32.totalorder %s19, 7
  %s21 = scalar_select %p20, %s19, 7
  %s22 = smul.addr %s21, 8
  %s23 = scalar_lea.vmem %s1, %s22
  %s24 = smul.u32 8, %s5
  %p25 = scmp.lt.s32.totalorder %s24, 7
  %s26 = scalar_select %p25, %s24, 7
  %s27 = smul.addr %s26, 8
  %s28 = scalar_lea.vmem %s0, %s27
  %s29 = smul.u32 8, %s5
  %s30 = smul.u32 8, %s5
  %p31 = scmp.lt.s32.totalorder %s30, 7
  %s32 = scalar_select %p31, %s30, 7
  %s33 = smul.addr %s32, 8
  %s34 = scalar_lea.vmem %s1, %s33
  %s35 = smul.u32 8, %s5
  %v36 = vlaneseq
  %v37 = vand.u32 %v36, 127
  %v38 = vcvt.s32.f32 %v37
  %v39 = vmul.f32 %v38, 0.10204082
  %v40 = vadd.f32 %v39, 0.0
  %v41 = vld [vmem:[%s28] sm:$0xff]
  %v42 = vld [vmem:[%s28 + $0x8] sm:$0xff]
  %v43 = vld [vmem:[%s28 + $0x10] sm:$0xff]
  %v44 = vld [vmem:[%s28 + $0x18] sm:$0xff]
  %v45 = vld [vmem:[%s28 + $0x20] sm:$0xff]
  %v46 = vld [vmem:[%s28 + $0x28] sm:$0xff]
  %v47 = vld [vmem:[%s28 + $0x30] sm:$0xff]
  %v48 = vld [vmem:[%s28 + $0x38] sm:$0xff]
  %50 = vset.pattern.permute.xlu0 0
  %51 = vperm.xlu0 %50, %v41
  %v52 = vpop.permute.xlu0 %51
  %55 = vset.pattern.permute.xlu0 0
  %56 = vperm.xlu0 %55, %v42
  %v57 = vpop.permute.xlu0 %56
  %60 = vset.pattern.permute.xlu0 0
  %61 = vperm.xlu0 %60, %v43
  %v62 = vpop.permute.xlu0 %61
  %65 = vset.pattern.permute.xlu0 0
  %66 = vperm.xlu0 %65, %v44
  %v67 = vpop.permute.xlu0 %66
  %70 = vset.pattern.permute.xlu0 0
  %71 = vperm.xlu0 %70, %v45
  %v72 = vpop.permute.xlu0 %71
  %75 = vset.pattern.permute.xlu0 0
  %76 = vperm.xlu0 %75, %v46
  %v77 = vpop.permute.xlu0 %76
  %80 = vset.pattern.permute.xlu0 0
  %81 = vperm.xlu0 %80, %v47
  %v82 = vpop.permute.xlu0 %81
  %85 = vset.pattern.permute.xlu0 0
  %86 = vperm.xlu0 %85, %v48
  %v87 = vpop.permute.xlu0 %86
  %v89 = vsub.f32 %v52, %v40
  %v90 = vsub.f32 %v57, %v40
  %v91 = vsub.f32 %v62, %v40
  %v92 = vsub.f32 %v67, %v40
  %v93 = vsub.f32 %v72, %v40
  %v94 = vsub.f32 %v77, %v40
  %v95 = vsub.f32 %v82, %v40
  %v96 = vsub.f32 %v87, %v40
  %v97 = vmul.f32 %v89, -48.02
  %v98 = vmul.f32 %v90, -48.02
  %v99 = vmul.f32 %v91, -48.02
  %v100 = vmul.f32 %v92, -48.02
  %v101 = vmul.f32 %v93, -48.02
  %v102 = vmul.f32 %v94, -48.02
  %v103 = vmul.f32 %v95, -48.02
  %v104 = vmul.f32 %v96, -48.02
  %v105 = vmul.f32 %v97, %v89
  %v106 = vmul.f32 %v98, %v90
  %v107 = vmul.f32 %v99, %v91
  %v108 = vmul.f32 %v100, %v92
  %v109 = vmul.f32 %v101, %v93
  %v110 = vmul.f32 %v102, %v94
  %v111 = vmul.f32 %v103, %v95
  %v112 = vmul.f32 %v104, %v96
  %v113 = vmul.f32 %v105, 1.442695
  %v114 = vpow.pop %v113
  %v115 = vmul.f32 %v106, 1.442695
  %v116 = vpow.pop %v115
  %v117 = vmul.f32 %v107, 1.442695
  %v118 = vpow.pop %v117
  %v119 = vmul.f32 %v108, 1.442695
  %v120 = vpow.pop %v119
  %v121 = vmul.f32 %v109, 1.442695
  %v122 = vpow.pop %v121
  %v123 = vmul.f32 %v110, 1.442695
  %v124 = vpow.pop %v123
  %v125 = vmul.f32 %v111, 1.442695
  %v126 = vpow.pop %v125
  %v127 = vmul.f32 %v112, 1.442695
  %v128 = vpow.pop %v127
  %vm129 = vcmask 408576
  %130 = vst.msk [vmem:[%s34] sm:$0xff] %vm129, %v114
  %131 = vst.msk [vmem:[%s34 + $0x8] sm:$0xff] %vm129, %v116
  %132 = vst.msk [vmem:[%s34 + $0x10] sm:$0xff] %vm129, %v118
  %133 = vst.msk [vmem:[%s34 + $0x18] sm:$0xff] %vm129, %v120
  %134 = vst.msk [vmem:[%s34 + $0x20] sm:$0xff] %vm129, %v122
  %135 = vst.msk [vmem:[%s34 + $0x28] sm:$0xff] %vm129, %v124
  %136 = vst.msk [vmem:[%s34 + $0x30] sm:$0xff] %vm129, %v126
  %137 = vst.msk [vmem:[%s34 + $0x38] sm:$0xff] %vm129, %v128
  %s138 = smul.u32 8, %s5
  %p139 = scmp.lt.s32.totalorder %s138, 7
  %s140 = scalar_select %p139, %s138, 7
  %s141 = smul.addr %s140, 8
  %s142 = scalar_lea.vmem %s1, %s141
  // Predicated region
  $region6: #{tpu_custom_call.1} parent=0 // pred_check
    _
  $region7: #{tpu_custom_call.1} parent=0 // pred_check_branch
    %144 = sbr.rel (0) target = $region9
  $region8: #{tpu_custom_call.1} parent=0 // pred_region
    %s145 = smul.u32 8, %s5
  $region9: #{tpu_custom_call.1} parent=0 // pred_fallthru
    _
  // Predicated region
  $region10: #{tpu_custom_call.1} parent=0 // pred_check
    _
  $region11: #{tpu_custom_call.1} parent=0 // pred_check_branch
    %147 = sbr.rel (0) target = $region13
  $region12: #{tpu_custom_call.1} parent=0 // pred_region
    %s148 = smul.u32 8, %s5
    %p149 = scmp.lt.s32.totalorder %s148, 7
    %s150 = scalar_select %p149, %s148, 7
    %s151 = smul.addr %s150, 8
    %s152 = scalar_lea.vmem %s1, %s151
  $region13: #{tpu_custom_call.1} parent=0 // pred_fallthru
    _

// kernel: tpu_custom_call.1
$region0: #{tpu_custom_call.1}
  #allocation0 [shape = 'u32[]', space=smem, size = 0x4, offset = 0x4, fixed_abs, tag = 'smem constant byte address 0x4 - core index']
  #allocation1 [shape = 'u32[144,128]{1,0:T(1,128)}', space=vmem, size = 0x12000, scoped, tag = 'internal scratch']
  %s0 = inlined_call_operand.vmem [shape: f32[64,1], index: 0, kind: input, shape index: {}]
  %s1 = inlined_call_operand.vmem [shape: f32[64,50], index: 1, kind: output, shape index: {}]
  %s2 = sld [smem:[#allocation0]]
  $region14: #{tpu_custom_call.1} parent=0
    _
  %s4 = ssub.s32 1, %s2
  %s5 = scalar_select 0, %s4, %s2
  // Predicated region
  $region2: #{tpu_custom_call.1} parent=0 // pred_check
    _
  $region3: #{tpu_custom_call.1} parent=0 // pred_check_branch
    %7 = sbr.rel (0) target = $region5
  $region4: #{tpu_custom_call.1} parent=0 // pred_region
    _
  $region5: #{tpu_custom_call.1} parent=0 // pred_fallthru
    _
  %v8 = vlaneseq
  %v9 = vand.u32 %v8, 127
  %v10 = vcvt.s32.f32 %v9
  %v11 = vmul.f32 %v10, 0.10204082
  %v12 = vadd.f32 %v11, 0.0
  %v13 = vld [vmem:[%s0] sm:$0xff]
  %v14 = vld [vmem:[%s0 + $0x8] sm:$0xff]
  %v15 = vld [vmem:[%s0 + $0x10] sm:$0xff]
  %v16 = vld [vmem:[%s0 + $0x18] sm:$0xff]
  %v17 = vld [vmem:[%s0 + $0x20] sm:$0xff]
  %v18 = vld [vmem:[%s0 + $0x28] sm:$0xff]
  %v19 = vld [vmem:[%s0 + $0x30] sm:$0xff]
  %v20 = vld [vmem:[%s0 + $0x38] sm:$0xff]
  %22 = vset.pattern.permute.xlu0 0
  %23 = vperm.xlu0 %22, %v13
  %v24 = vpop.permute.xlu0 %23
  %27 = vset.pattern.permute.xlu0 0
  %28 = vperm.xlu0 %27, %v14
  %v29 = vpop.permute.xlu0 %28
  %32 = vset.pattern.permute.xlu0 0
  %33 = vperm.xlu0 %32, %v15
  %v34 = vpop.permute.xlu0 %33
  %37 = vset.pattern.permute.xlu0 0
  %38 = vperm.xlu0 %37, %v16
  %v39 = vpop.permute.xlu0 %38
  %42 = vset.pattern.permute.xlu0 0
  %43 = vperm.xlu0 %42, %v17
  %v44 = vpop.permute.xlu0 %43
  %47 = vset.pattern.permute.xlu0 0
  %48 = vperm.xlu0 %47, %v18
  %v49 = vpop.permute.xlu0 %48
  %52 = vset.pattern.permute.xlu0 0
  %53 = vperm.xlu0 %52, %v19
  %v54 = vpop.permute.xlu0 %53
  %57 = vset.pattern.permute.xlu0 0
  %58 = vperm.xlu0 %57, %v20
  %v59 = vpop.permute.xlu0 %58
  %v61 = vsub.f32 %v24, %v12
  %v62 = vsub.f32 %v29, %v12
  %v63 = vsub.f32 %v34, %v12
  %v64 = vsub.f32 %v39, %v12
  %v65 = vsub.f32 %v44, %v12
  %v66 = vsub.f32 %v49, %v12
  %v67 = vsub.f32 %v54, %v12
  %v68 = vsub.f32 %v59, %v12
  %v69 = vmul.f32 %v61, -48.02
  %v70 = vmul.f32 %v62, -48.02
  %v71 = vmul.f32 %v63, -48.02
  %v72 = vmul.f32 %v64, -48.02
  %v73 = vmul.f32 %v65, -48.02
  %v74 = vmul.f32 %v66, -48.02
  %v75 = vmul.f32 %v67, -48.02
  %v76 = vmul.f32 %v68, -48.02
  %v77 = vmul.f32 %v69, %v61
  %v78 = vmul.f32 %v70, %v62
  %v79 = vmul.f32 %v71, %v63
  %v80 = vmul.f32 %v72, %v64
  %v81 = vmul.f32 %v73, %v65
  %v82 = vmul.f32 %v74, %v66
  %v83 = vmul.f32 %v75, %v67
  %v84 = vmul.f32 %v76, %v68
  %v85 = vmul.f32 %v77, 1.442695
  %v86 = vpow.pop %v85
  %v87 = vmul.f32 %v78, 1.442695
  %v88 = vpow.pop %v87
  %v89 = vmul.f32 %v79, 1.442695
  %v90 = vpow.pop %v89
  %v91 = vmul.f32 %v80, 1.442695
  %v92 = vpow.pop %v91
  %v93 = vmul.f32 %v81, 1.442695
  %v94 = vpow.pop %v93
  %v95 = vmul.f32 %v82, 1.442695
  %v96 = vpow.pop %v95
  %v97 = vmul.f32 %v83, 1.442695
  %v98 = vpow.pop %v97
  %v99 = vmul.f32 %v84, 1.442695
  %v100 = vpow.pop %v99
  %vm101 = vcmask 408576
  %102 = vst.msk [vmem:[%s1] sm:$0xff] %vm101, %v86
  %103 = vst.msk [vmem:[%s1 + $0x8] sm:$0xff] %vm101, %v88
  %104 = vst.msk [vmem:[%s1 + $0x10] sm:$0xff] %vm101, %v90
  %105 = vst.msk [vmem:[%s1 + $0x18] sm:$0xff] %vm101, %v92
  %106 = vst.msk [vmem:[%s1 + $0x20] sm:$0xff] %vm101, %v94
  %107 = vst.msk [vmem:[%s1 + $0x28] sm:$0xff] %vm101, %v96
  %108 = vst.msk [vmem:[%s1 + $0x30] sm:$0xff] %vm101, %v98
  %109 = vst.msk [vmem:[%s1 + $0x38] sm:$0xff] %vm101, %v100
  // Predicated region
  $region6: #{tpu_custom_call.1} parent=0 // pred_check
    _
  $region7: #{tpu_custom_call.1} parent=0 // pred_check_branch
    %111 = sbr.rel (0) target = $region9
  $region8: #{tpu_custom_call.1} parent=0 // pred_region
    _
  $region9: #{tpu_custom_call.1} parent=0 // pred_fallthru
    _
  // Predicated region
  $region10: #{tpu_custom_call.1} parent=0 // pred_check
    _
  $region11: #{tpu_custom_call.1} parent=0 // pred_check_branch
    %113 = sbr.rel (0) target = $region13
  $region12: #{tpu_custom_call.1} parent=0 // pred_region
    _
  $region13: #{tpu_custom_call.1} parent=0 // pred_fallthru
    _

</llo_original>
